<compile_context>
chip_gen: v7x
topology: tpu7x:2x2x1
jax: 0.10.0
libtpu: 0.0.40
codegen_flags: <defaults>
</compile_context>

<pallas_src>
import jax
import jax.numpy as jnp
from jax.experimental import pallas as pl
from jax.experimental.pallas import tpu as pltpu


_LAYER_DIMS = ((16, 128), (128, 64), (64, 32), (32, 16))
# Row range of each (K-padded) weight inside the packed slab.
_W_ROWS = ((0, 16), (16, 144), (144, 272), (272, 400))
_SLAB_ROWS = 400        # 16 + 128 + 128 + 128 (multiple of 8 and of 16 for bf16)
_LANES = 128


def _mlp_kernel(x_ref, w_ref, b_ref, o_ref):
    # x: (TB, 16) f32 -> bf16 for the MXU.
    x = x_ref[...].astype(jnp.bfloat16)

    # Static slices of the packed weight slab (sublane-aligned ref views).
    w1 = w_ref[0:16, :]      # (16, 128)  bf16
    w2 = w_ref[16:144, :]    # (128, 128) bf16 (cols 64..127 zero)
    w3 = w_ref[144:272, :]   # (128, 128) bf16 (rows 64.., cols 32.. zero)
    w4 = w_ref[272:400, :]   # (128, 128) bf16 (rows 32.., cols 16.. zero)

    b1 = b_ref[0:1, :]       # (1, 128) f32, padded lanes zero
    b2 = b_ref[1:2, :]
    b3 = b_ref[2:3, :]
    b4 = b_ref[3:4, :]

    # dense_1 + relu : (TB,16) @ (16,128) -> (TB,128) f32
    h = jnp.dot(x, w1, preferred_element_type=jnp.float32) + b1
    h = jnp.maximum(h, 0.0)
    # dense_2 + relu : (TB,128) @ (128,128) -> (TB,128) (lanes 64.. stay 0)
    h = jnp.dot(h.astype(jnp.bfloat16), w2, preferred_element_type=jnp.float32) + b2
    h = jnp.maximum(h, 0.0)
    # dense_3 + relu : (lanes 32.. stay 0)
    h = jnp.dot(h.astype(jnp.bfloat16), w3, preferred_element_type=jnp.float32) + b3
    h = jnp.maximum(h, 0.0)
    # dense_4 (torch .detach() only affects gradients; forward identical)
    logit = jnp.dot(h.astype(jnp.bfloat16), w4, preferred_element_type=jnp.float32) + b4
    # sigmoid in f32 (exp on the EUP).
    out = 1.0 / (1.0 + jnp.exp(-logit))
    o_ref[...] = out[:, :16].astype(o_ref.dtype)


def pack_params(params):
    """Pack per-layer (W (in,out) f32, b (out,) f32) into one bf16 weight slab
    and one f32 bias slab. In production this runs once, not per call."""
    w_slab = jnp.zeros((_SLAB_ROWS, _LANES), jnp.float32)
    b_slab = jnp.zeros((8, _LANES), jnp.float32)
    for i, ((w, b), (fin, fout), (r0, _)) in enumerate(
            zip(params, _LAYER_DIMS, _W_ROWS)):
        assert w.shape == (fin, fout) and b.shape == (fout,)
        w_slab = w_slab.at[r0:r0 + fin, :fout].set(w)
        b_slab = b_slab.at[i, :fout].set(b)
    return w_slab.astype(jnp.bfloat16), b_slab


def latent_discriminator(x, params, *, tb_max=512):
    """x: (B, ...) with prod(trailing dims) == 16. Returns (B, 16) scores."""
    B = x.shape[0]
    x_flat = x.reshape(B, -1).astype(jnp.float32)   # == torch input.view(B, -1)
    assert x_flat.shape[1] == 16, "flattened feature dim must be 16"

    w_slab, b_slab = pack_params(params)

    # Batch tiling: one full-extent tile if B is small, otherwise fixed
    # tb_max-row tiles (multiple of 8) with zero-padding of the partial tile.
    if B <= tb_max:
        tb, b_pad = B, B
    else:
        tb = tb_max
        b_pad = pl.cdiv(B, tb) * tb
    if b_pad != B:
        x_flat = jnp.pad(x_flat, ((0, b_pad - B), (0, 0)))

    out = pl.pallas_call(
        _mlp_kernel,
        out_shape=jax.ShapeDtypeStruct((b_pad, 16), jnp.float32),
        grid=(b_pad // tb,),
        in_specs=[
            pl.BlockSpec((tb, 16), lambda i: (i, 0)),
            pl.BlockSpec((_SLAB_ROWS, _LANES), lambda i: (0, 0)),
            pl.BlockSpec((8, _LANES), lambda i: (0, 0)),
        ],
        out_specs=pl.BlockSpec((tb, 16), lambda i: (i, 0)),
        compiler_params=pltpu.CompilerParams(
            dimension_semantics=("parallel",)),   # megacore sharding on v7x
    )(x_flat, w_slab, b_slab)
    return out[:B]


def init_params(key):
    """Deterministic init matching nn.Linear scales; weights stored (in, out)."""
    params = []
    for fan_in, fan_out in _LAYER_DIMS:
        key, kw, kb = jax.random.split(key, 3)
        bound = 1.0 / (fan_in ** 0.5)
        w = jax.random.uniform(kw, (fan_in, fan_out), jnp.float32, -bound, bound)
        b = jax.random.uniform(kb, (fan_out,), jnp.float32, -bound, bound)
        params.append((w, b))
    return params


def reference_forward(x, params):
    """Pure-JAX reference mirroring the kernel's bf16-matmul / f32-elementwise
    split (same numerics as the torch forward up to bf16 matmul rounding)."""
    h = x.reshape(x.shape[0], -1).astype(jnp.float32)
    for i, (w, b) in enumerate(params):
        h = jnp.dot(h.astype(jnp.bfloat16), w.astype(jnp.bfloat16),
                    preferred_element_type=jnp.float32) + b
        if i < len(params) - 1:
            h = jnp.maximum(h, 0.0)
    return 1.0 / (1.0 + jnp.exp(-h))


if __name__ == "__main__":
    key = jax.random.PRNGKey(0)
    k_in, k_par = jax.random.split(key)

    # (B, C, L) with C*L == 16 so input.view(B, -1) matches dense_1's 16 inputs.
    B, C, L = 2, 4, 4
    x = jax.random.normal(k_in, (B, C, L), jnp.float32)

    params = init_params(k_par)

    out = latent_discriminator(x, params)
    out = jax.block_until_ready(out)

    ref = reference_forward(x, params)
    assert out.shape == (B, 16), out.shape
    assert jnp.allclose(out, ref, atol=1e-4, rtol=1e-4), (out, ref)

    print("KERNEL_OK")
</pallas_src>

<mosaic_0001>
module attributes {stable_mosaic.version = 11 : i64} {
  func.func @_mlp_kernel(%arg0: i32, %arg1: memref<2x16xf32, #tpu.memory_space<vmem>>, %arg2: memref<400x128xbf16, #tpu.memory_space<vmem>>, %arg3: memref<8x128xf32, #tpu.memory_space<vmem>>, %arg4: memref<2x16xf32, #tpu.memory_space<vmem>>) attributes {dimension_semantics = [#tpu.dimension_semantics<parallel>], iteration_bounds = array<i64: 1>, scalar_prefetch = 0 : i64, scratch_operands = 0 : i64, tpu.core_type = #tpu.core_type<tc>, window_params = [{transform_indices = @transform_0, window_bounds = array<i64: 2, 16>}, {pipeline_mode = #tpu.pipeline_mode<synchronous>, transform_indices = @transform_1, window_bounds = array<i64: 400, 128>}, {pipeline_mode = #tpu.pipeline_mode<synchronous>, transform_indices = @transform_2, window_bounds = array<i64: 8, 128>}, {transform_indices = @transform_3, window_bounds = array<i64: 2, 16>}]} {
    %c0 = arith.constant 0 : index
    %c0_0 = arith.constant 0 : index
    %0 = vector.load %arg1[%c0, %c0_0] : memref<2x16xf32, #tpu.memory_space<vmem>>, vector<2x16xf32>
    %1 = arith.truncf %0 : vector<2x16xf32> to vector<2x16xbf16>
    %c0_1 = arith.constant 0 : index
    %c0_2 = arith.constant 0 : index
    %2 = vector.load %arg2[%c0_1, %c0_2] : memref<400x128xbf16, #tpu.memory_space<vmem>>, vector<16x128xbf16>
    %c16 = arith.constant 16 : index
    %c0_3 = arith.constant 0 : index
    %3 = vector.load %arg2[%c16, %c0_3] : memref<400x128xbf16, #tpu.memory_space<vmem>>, vector<128x128xbf16>
    %c144 = arith.constant 144 : index
    %c0_4 = arith.constant 0 : index
    %4 = vector.load %arg2[%c144, %c0_4] : memref<400x128xbf16, #tpu.memory_space<vmem>>, vector<128x128xbf16>
    %c272 = arith.constant 272 : index
    %c0_5 = arith.constant 0 : index
    %5 = vector.load %arg2[%c272, %c0_5] : memref<400x128xbf16, #tpu.memory_space<vmem>>, vector<128x128xbf16>
    %c0_6 = arith.constant 0 : index
    %c0_7 = arith.constant 0 : index
    %6 = vector.load %arg3[%c0_6, %c0_7] : memref<8x128xf32, #tpu.memory_space<vmem>>, vector<1x128xf32>
    %c1 = arith.constant 1 : index
    %c0_8 = arith.constant 0 : index
    %7 = vector.load %arg3[%c1, %c0_8] : memref<8x128xf32, #tpu.memory_space<vmem>>, vector<1x128xf32>
    %c2 = arith.constant 2 : index
    %c0_9 = arith.constant 0 : index
    %8 = vector.load %arg3[%c2, %c0_9] : memref<8x128xf32, #tpu.memory_space<vmem>>, vector<1x128xf32>
    %c3 = arith.constant 3 : index
    %c0_10 = arith.constant 0 : index
    %9 = vector.load %arg3[%c3, %c0_10] : memref<8x128xf32, #tpu.memory_space<vmem>>, vector<1x128xf32>
    %cst = arith.constant dense<0.000000e+00> : vector<2x128xf32>
    %10 = tpu.matmul %1, %2, %cst {dimension_numbers = #tpu.dot_dimension_numbers<[1], [0], [0], [1], [0, 0, 1, 1], [], []>} : vector<2x16xbf16>, vector<16x128xbf16>, vector<2x128xf32> -> vector<2x128xf32>
    %11 = vector.broadcast %6 : vector<1x128xf32> to vector<2x128xf32>
    %12 = arith.addf %10, %11 : vector<2x128xf32>
    %cst_11 = arith.constant 0.000000e+00 : f32
    %13 = vector.broadcast %cst_11 : f32 to vector<2x128xf32>
    %14 = arith.maximumf %12, %13 : vector<2x128xf32>
    %15 = arith.truncf %14 : vector<2x128xf32> to vector<2x128xbf16>
    %cst_12 = arith.constant dense<0.000000e+00> : vector<2x128xf32>
    %16 = tpu.matmul %15, %3, %cst_12 {dimension_numbers = #tpu.dot_dimension_numbers<[1], [0], [0], [1], [0, 0, 1, 1], [], []>} : vector<2x128xbf16>, vector<128x128xbf16>, vector<2x128xf32> -> vector<2x128xf32>
    %17 = vector.broadcast %7 : vector<1x128xf32> to vector<2x128xf32>
    %18 = arith.addf %16, %17 : vector<2x128xf32>
    %cst_13 = arith.constant 0.000000e+00 : f32
    %19 = vector.broadcast %cst_13 : f32 to vector<2x128xf32>
    %20 = arith.maximumf %18, %19 : vector<2x128xf32>
    %21 = arith.truncf %20 : vector<2x128xf32> to vector<2x128xbf16>
    %cst_14 = arith.constant dense<0.000000e+00> : vector<2x128xf32>
    %22 = tpu.matmul %21, %4, %cst_14 {dimension_numbers = #tpu.dot_dimension_numbers<[1], [0], [0], [1], [0, 0, 1, 1], [], []>} : vector<2x128xbf16>, vector<128x128xbf16>, vector<2x128xf32> -> vector<2x128xf32>
    %23 = vector.broadcast %8 : vector<1x128xf32> to vector<2x128xf32>
    %24 = arith.addf %22, %23 : vector<2x128xf32>
    %cst_15 = arith.constant 0.000000e+00 : f32
    %25 = vector.broadcast %cst_15 : f32 to vector<2x128xf32>
    %26 = arith.maximumf %24, %25 : vector<2x128xf32>
    %27 = arith.truncf %26 : vector<2x128xf32> to vector<2x128xbf16>
    %cst_16 = arith.constant dense<0.000000e+00> : vector<2x128xf32>
    %28 = tpu.matmul %27, %5, %cst_16 {dimension_numbers = #tpu.dot_dimension_numbers<[1], [0], [0], [1], [0, 0, 1, 1], [], []>} : vector<2x128xbf16>, vector<128x128xbf16>, vector<2x128xf32> -> vector<2x128xf32>
    %29 = vector.broadcast %9 : vector<1x128xf32> to vector<2x128xf32>
    %30 = arith.addf %28, %29 : vector<2x128xf32>
    %cst_17 = arith.constant 0.000000e+00 : f32
    %31 = vector.broadcast %cst_17 : f32 to vector<2x128xf32>
    %32 = arith.subf %31, %30 : vector<2x128xf32>
    %33 = math.exp %32 : vector<2x128xf32>
    %cst_18 = arith.constant 1.000000e+00 : f32
    %34 = vector.broadcast %cst_18 : f32 to vector<2x128xf32>
    %35 = arith.addf %34, %33 : vector<2x128xf32>
    %cst_19 = arith.constant 1.000000e+00 : f32
    %36 = vector.broadcast %cst_19 : f32 to vector<2x128xf32>
    %37 = arith.divf %36, %35 : vector<2x128xf32>
    %38 = vector.extract_strided_slice %37 {offsets = [0, 0], sizes = [2, 16], strides = [1, 1]} : vector<2x128xf32> to vector<2x16xf32>
    %c0_20 = arith.constant 0 : index
    %c0_21 = arith.constant 0 : index
    %39 = vector.load %arg4[%c0_20, %c0_21] : memref<2x16xf32, #tpu.memory_space<vmem>>, vector<2x16xf32>
    tpu.vector_store %arg4[%c0_20, %c0_21], %38 {strides = array<i32>} : memref<2x16xf32, #tpu.memory_space<vmem>>, vector<2x16xf32>,
    return
  }
  func.func @transform_0(%arg0: i32) -> (i32, i32) {
    %c0_i32 = arith.constant 0 : i32
    %c0_i32_0 = arith.constant 0 : i32
    return %arg0, %c0_i32 : i32, i32
  }
  func.func @transform_1(%arg0: i32) -> (i32, i32) {
    %c0_i32 = arith.constant 0 : i32
    %c0_i32_0 = arith.constant 0 : i32
    %c0_i32_1 = arith.constant 0 : i32
    return %c0_i32, %c0_i32_0 : i32, i32
  }
  func.func @transform_2(%arg0: i32) -> (i32, i32) {
    %c0_i32 = arith.constant 0 : i32
    %c0_i32_0 = arith.constant 0 : i32
    %c0_i32_1 = arith.constant 0 : i32
    return %c0_i32, %c0_i32_0 : i32, i32
  }
  func.func @transform_3(%arg0: i32) -> (i32, i32) {
    %c0_i32 = arith.constant 0 : i32
    %c0_i32_0 = arith.constant 0 : i32
    return %arg0, %c0_i32 : i32, i32
  }
}

</mosaic_0001>

<llo_original>
// kernel: tpu_custom_call.1
$region0: #{tpu_custom_call.1}
  #allocation0 [shape = 'u32[]', space=smem, size = 0x4, offset = 0x4, fixed_abs, tag = 'smem constant byte address 0x4 - core index']
  #allocation1 [shape = 'u32[144,128]{1,0:T(1,128)}', space=vmem, size = 0x12000, scoped, tag = 'internal scratch']
  %s0 = inlined_call_operand.hbm [shape: f32[2,16], index: 0, kind: input, shape index: {}]
  %s1 = inlined_call_operand.hbm [shape: bf16[400,128], index: 1, kind: input, shape index: {}]
  %s2 = inlined_call_operand.hbm [shape: f32[8,128], index: 2, kind: input, shape index: {}]
  %s3 = inlined_call_operand.hbm [shape: f32[2,16], index: 3, kind: output, shape index: {}]
  %s4 = sld [smem:[#allocation0]]
  $region34: #{tpu_custom_call.1} parent=0
    _
  %s6 = ssub.s32 1, %s4
  %s7 = scalar_select 0, %s6, %s4
  $region1: #{tpu_custom_call.1} parent=0
    #allocation2 [shape = 'u8[1024]{0}', space=vmem, size = 0x400, scoped, tag = 'input window, operand 0, single buffered']
    #allocation3 [shape = 's32[1]{0}', space=sflag, size = 0x4, scoped, tag = 'scoped memory for tpu_custom_call.1']
    #allocation4 [shape = 's32[1]{0}', space=sflag, size = 0x4, scoped, tag = 'scoped memory for tpu_custom_call.1']
    #allocation5 [shape = 'u8[102400]{0}', space=vmem, size = 0x19000, scoped, tag = 'input window, operand 1, single buffered']
    #allocation6 [shape = 's32[1]{0}', space=sflag, size = 0x4, scoped, tag = 'scoped memory for tpu_custom_call.1']
    #allocation7 [shape = 'u8[4096]{0}', space=vmem, size = 0x1000, scoped, tag = 'input window, operand 2, single buffered']
    #allocation8 [shape = 'u8[1024]{0}', space=vmem, size = 0x400, scoped, tag = 'output window, operand 0, single buffered']
    %8 = vsyncpa [#allocation3], 0
    %9 = vsyncpa [#allocation6], 0
    %10 = vsyncpa [#allocation4], 0
    // Predicated region
    $region2: #{tpu_custom_call.1} parent=1 // pred_check
      _
    $region3: #{tpu_custom_call.1} parent=1 // pred_check_branch
      %12 = sbr.rel (0) target = $region5
    $region4: #{tpu_custom_call.1} parent=1 // pred_region
      %s14 = ssub.s32 32, 32
      %15 = vsyncadd [#allocation3], %s14
      %s17 = sshll.u32 [#allocation2], 4
      %s18 = int_to_ptr.vmem [resolvable:$true] %s17
      %20 = dma.hbm_to_vmem [thread:$0]  %s0, 32, %s18, [#allocation3]
    $region5: #{tpu_custom_call.1} parent=1 // pred_fallthru
      _
    // Predicated region
    $region6: #{tpu_custom_call.1} parent=1 // pred_check
      _
    $region7: #{tpu_custom_call.1} parent=1 // pred_check_branch
      %22 = sbr.rel (0) target = $region9
    $region8: #{tpu_custom_call.1} parent=1 // pred_region
      %s24 = ssub.s32 3200, 3200
      %25 = vsyncadd [#allocation6], %s24
      %s26 = sshll.u32 [#allocation5], 4
      %s27 = int_to_ptr.vmem [resolvable:$true] %s26
      %32 = dma.hbm_to_vmem [thread:$0]  %s1, 3200, %s27, [#allocation6], 64, 64, 4
    $region9: #{tpu_custom_call.1} parent=1 // pred_fallthru
      _
    // Predicated region
    $region10: #{tpu_custom_call.1} parent=1 // pred_check
      _
    $region11: #{tpu_custom_call.1} parent=1 // pred_check_branch
      %34 = sbr.rel (0) target = $region13
    $region12: #{tpu_custom_call.1} parent=1 // pred_region
      %s36 = ssub.s32 128, 128
      %37 = vsyncadd [#allocation6], %s36
      %s39 = sshll.u32 [#allocation7], 4
      %s40 = int_to_ptr.vmem [resolvable:$true] %s39
      %42 = dma.hbm_to_vmem [thread:$0]  %s2, 128, %s40, [#allocation6]
    $region13: #{tpu_custom_call.1} parent=1 // pred_fallthru
      _
    // Predicated region
    $region14: #{tpu_custom_call.1} parent=1 // pred_check
      _
    $region15: #{tpu_custom_call.1} parent=1 // pred_check_branch
      %44 = sbr.rel (0) target = $region17
    $region16: #{tpu_custom_call.1} parent=1 // pred_region
      %45 = dma.done [#allocation3], 32
    $region17: #{tpu_custom_call.1} parent=1 // pred_fallthru
      _
    // Predicated region
    $region18: #{tpu_custom_call.1} parent=1 // pred_check
      _
    $region19: #{tpu_custom_call.1} parent=1 // pred_check_branch
      %47 = sbr.rel (0) target = $region21
    $region20: #{tpu_custom_call.1} parent=1 // pred_region
      %48 = dma.done [#allocation6], 3200
    $region21: #{tpu_custom_call.1} parent=1 // pred_fallthru
      _
    // Predicated region
    $region22: #{tpu_custom_call.1} parent=1 // pred_check
      _
    $region23: #{tpu_custom_call.1} parent=1 // pred_check_branch
      %50 = sbr.rel (0) target = $region25
    $region24: #{tpu_custom_call.1} parent=1 // pred_region
      %51 = dma.done [#allocation6], 128
    $region25: #{tpu_custom_call.1} parent=1 // pred_fallthru
      _
    %v53 = vld [vmem:[#allocation2] sm:$0x3]
    %v54 = vpack.c.bf16 %v53, %v53
    %v55 = vld [vmem:[#allocation5] sm:$0xf]
    %v56 = vld [vmem:[#allocation5 + $0x4] sm:$0xf]
    %v57 = vld [vmem:[#allocation5 + $0x8] sm:$0xf]
    %v58 = vld [vmem:[#allocation5 + $0xc] sm:$0xf]
    %v59 = vld [vmem:[#allocation5 + $0x10] sm:$0xf]
    %v60 = vld [vmem:[#allocation5 + $0x14] sm:$0xf]
    %v61 = vld [vmem:[#allocation5 + $0x18] sm:$0xf]
    %v62 = vld [vmem:[#allocation5 + $0x1c] sm:$0xf]
    %v63 = vld [vmem:[#allocation5 + $0x20] sm:$0xf]
    %v64 = vld [vmem:[#allocation5 + $0x24] sm:$0xf]
    %v65 = vld [vmem:[#allocation5 + $0x28] sm:$0xf]
    %v66 = vld [vmem:[#allocation5 + $0x2c] sm:$0xf]
    %v67 = vld [vmem:[#allocation5 + $0x30] sm:$0xf]
    %v68 = vld [vmem:[#allocation5 + $0x34] sm:$0xf]
    %v69 = vld [vmem:[#allocation5 + $0x38] sm:$0xf]
    %v70 = vld [vmem:[#allocation5 + $0x3c] sm:$0xf]
    %v71 = vld [vmem:[#allocation5 + $0x40] sm:$0xf]
    %v72 = vld [vmem:[#allocation5 + $0x44] sm:$0xf]
    %v73 = vld [vmem:[#allocation5 + $0x48] sm:$0xf]
    %v74 = vld [vmem:[#allocation5 + $0x4c] sm:$0xf]
    %v75 = vld [vmem:[#allocation5 + $0x50] sm:$0xf]
    %v76 = vld [vmem:[#allocation5 + $0x54] sm:$0xf]
    %v77 = vld [vmem:[#allocation5 + $0x58] sm:$0xf]
    %v78 = vld [vmem:[#allocation5 + $0x5c] sm:$0xf]
    %v79 = vld [vmem:[#allocation5 + $0x60] sm:$0xf]
    %v80 = vld [vmem:[#allocation5 + $0x64] sm:$0xf]
    %v81 = vld [vmem:[#allocation5 + $0x68] sm:$0xf]
    %v82 = vld [vmem:[#allocation5 + $0x6c] sm:$0xf]
    %v83 = vld [vmem:[#allocation5 + $0x70] sm:$0xf]
    %v84 = vld [vmem:[#allocation5 + $0x74] sm:$0xf]
    %v85 = vld [vmem:[#allocation5 + $0x78] sm:$0xf]
    %v86 = vld [vmem:[#allocation5 + $0x7c] sm:$0xf]
    %v87 = vld [vmem:[#allocation5 + $0x80] sm:$0xf]
    %v88 = vld [vmem:[#allocation5 + $0x84] sm:$0xf]
    %v89 = vld [vmem:[#allocation5 + $0x88] sm:$0xf]
    %v90 = vld [vmem:[#allocation5 + $0x8c] sm:$0xf]
    %v91 = vld [vmem:[#allocation5 + $0x90] sm:$0xf]
    %v92 = vld [vmem:[#allocation5 + $0x94] sm:$0xf]
    %v93 = vld [vmem:[#allocation5 + $0x98] sm:$0xf]
    %v94 = vld [vmem:[#allocation5 + $0x9c] sm:$0xf]
    %v95 = vld [vmem:[#allocation5 + $0xa0] sm:$0xf]
    %v96 = vld [vmem:[#allocation5 + $0xa4] sm:$0xf]
    %v97 = vld [vmem:[#allocation5 + $0xa8] sm:$0xf]
    %v98 = vld [vmem:[#allocation5 + $0xac] sm:$0xf]
    %v99 = vld [vmem:[#allocation5 + $0xb0] sm:$0xf]
    %v100 = vld [vmem:[#allocation5 + $0xb4] sm:$0xf]
    %v101 = vld [vmem:[#allocation5 + $0xb8] sm:$0xf]
    %v102 = vld [vmem:[#allocation5 + $0xbc] sm:$0xf]
    %v103 = vld [vmem:[#allocation5 + $0xc0] sm:$0xf]
    %v104 = vld [vmem:[#allocation5 + $0xc4] sm:$0xf]
    %v105 = vld [vmem:[#allocation7] sm:$0x1]
    %v106 = vld [vmem:[#allocation7 + $0x1] sm:$0x1]
    %v107 = vld [vmem:[#allocation7 + $0x2] sm:$0x1]
    %v108 = vld [vmem:[#allocation7 + $0x3] sm:$0x1]
    %v109 = vlaneseq
    %v110 = vshrl.u32 %v109, 7
    %v111 = vsub.s32 0, %v110
    %v112 = vrot.slane %v105, %v111
    %v115 = vunpack.c.l.b16 %v55
    %v116 = vunpack.c.l.b16 %v56
    %v117 = vpack.c.b16 %v116, %v115
    %vm119 = vcmask 130048
    %v121 = vsel %vm119, %v54, 0
    %123 = vmatprep.subr.bf16.mxu0 0
    %124 = vmatpush1.bf16.msra.mxu0 %v117
    %125 = vmatprep.subr.bf16.mxu0 0
    %126 = vmatpush1.bf16.msra.mxu0 0
    %127 = vmatprep.subr.bf16.mxu0 0
    %128 = vmatpush1.bf16.msra.mxu0 0
    %129 = vmatprep.subr.bf16.mxu0 0
    %130 = vmatpush1.bf16.msra.mxu0 0
    %131 = vmatprep.subr.bf16.mxu0 0
    %132 = vmatpush1.bf16.msra.mxu0 0
    %133 = vmatprep.subr.bf16.mxu0 0
    %134 = vmatpush1.bf16.msra.mxu0 0
    %135 = vmatprep.subr.bf16.mxu0 0
    %136 = vmatpush1.bf16.msra.mxu0 0
    %137 = vmatprep.subr.bf16.mxu0 0
    %138 = vmatpush1.bf16.msra.mxu0 0
    %139 = vmatprep.subr.bf16.mxu0 0
    %140 = vmatpush1.bf16.msra.mxu0 0
    %141 = vmatprep.subr.bf16.mxu0 0
    %142 = vmatpush1.bf16.msra.mxu0 0
    %143 = vmatprep.subr.bf16.mxu0 0
    %144 = vmatpush1.bf16.msra.mxu0 0
    %145 = vmatprep.subr.bf16.mxu0 0
    %146 = vmatpush1.bf16.msra.mxu0 0
    %147 = vmatprep.subr.bf16.mxu0 0
    %148 = vmatpush1.bf16.msra.mxu0 0
    %149 = vmatprep.subr.bf16.mxu0 0
    %150 = vmatpush1.bf16.msra.mxu0 0
    %151 = vmatprep.subr.bf16.mxu0 0
    %152 = vmatpush1.bf16.msra.mxu0 0
    %153 = vmatprep.subr.bf16.mxu0 0
    %154 = vmatpush1.bf16.msra.mxu0 0
    %155 = vmatprep.mubr.bf16.mxu0 0
    %156 = vmatmul.mubr.bf16.gmra.mrb[0].mxu0 %v121
    %v157 = vpop.f32.mrb[0].mxu0
    %v158 = vadd.f32 %v112, %v157
    %v159 = vpop.f32.mrb[0].mxu0
    %v160 = vpop.f32.mrb[0].mxu0
    %v161 = vpop.f32.mrb[0].mxu0
    %162 = vdwg.mxu0
    %v163 = vmax.f32 %v158, 0.0
    %v164 = vpack.c.bf16 %v163, %v163
    %v165 = vlaneseq
    %v166 = vshrl.u32 %v165, 7
    %v167 = vsub.s32 0, %v166
    %v168 = vrot.slane %v106, %v167
    %v185 = vunpack.c.l.b16 %v57
    %v186 = vunpack.c.l.b16 %v58
    %v187 = vunpack.c.l.b16 %v59
    %v188 = vunpack.c.l.b16 %v60
    %v189 = vunpack.c.l.b16 %v61
    %v190 = vunpack.c.l.b16 %v62
    %v191 = vunpack.c.l.b16 %v63
    %v192 = vunpack.c.l.b16 %v64
    %v193 = vunpack.c.l.b16 %v65
    %v194 = vunpack.c.l.b16 %v66
    %v195 = vunpack.c.l.b16 %v67
    %v196 = vunpack.c.l.b16 %v68
    %v197 = vunpack.c.l.b16 %v69
    %v198 = vunpack.c.l.b16 %v70
    %v199 = vunpack.c.l.b16 %v71
    %v200 = vunpack.c.l.b16 %v72
    %v201 = vpack.c.b16 %v186, %v185
    %v202 = vpack.c.b16 %v188, %v187
    %v203 = vpack.c.b16 %v190, %v189
    %v204 = vpack.c.b16 %v192, %v191
    %v205 = vpack.c.b16 %v194, %v193
    %v206 = vpack.c.b16 %v196, %v195
    %v207 = vpack.c.b16 %v198, %v197
    %v208 = vpack.c.b16 %v200, %v199
    %217 = vmatprep.subr.bf16.mxu0 0
    %218 = vmatpush1.bf16.msra.mxu0 %v201
    %219 = vmatprep.subr.bf16.mxu0 0
    %220 = vmatpush1.bf16.msra.mxu0 %v202
    %221 = vmatprep.subr.bf16.mxu0 0
    %222 = vmatpush1.bf16.msra.mxu0 %v203
    %223 = vmatprep.subr.bf16.mxu0 0
    %224 = vmatpush1.bf16.msra.mxu0 %v204
    %225 = vmatprep.subr.bf16.mxu0 0
    %226 = vmatpush1.bf16.msra.mxu0 %v205
    %227 = vmatprep.subr.bf16.mxu0 0
    %228 = vmatpush1.bf16.msra.mxu0 %v206
    %229 = vmatprep.subr.bf16.mxu0 0
    %230 = vmatpush1.bf16.msra.mxu0 %v207
    %231 = vmatprep.subr.bf16.mxu0 0
    %232 = vmatpush1.bf16.msra.mxu0 %v208
    %233 = vmatprep.subr.bf16.mxu0 0
    %234 = vmatpush1.bf16.msra.mxu0 0
    %235 = vmatprep.subr.bf16.mxu0 0
    %236 = vmatpush1.bf16.msra.mxu0 0
    %237 = vmatprep.subr.bf16.mxu0 0
    %238 = vmatpush1.bf16.msra.mxu0 0
    %239 = vmatprep.subr.bf16.mxu0 0
    %240 = vmatpush1.bf16.msra.mxu0 0
    %241 = vmatprep.subr.bf16.mxu0 0
    %242 = vmatpush1.bf16.msra.mxu0 0
    %243 = vmatprep.subr.bf16.mxu0 0
    %244 = vmatpush1.bf16.msra.mxu0 0
    %245 = vmatprep.subr.bf16.mxu0 0
    %246 = vmatpush1.bf16.msra.mxu0 0
    %247 = vmatprep.subr.bf16.mxu0 0
    %248 = vmatpush1.bf16.msra.mxu0 0
    %249 = vmatprep.mubr.bf16.mxu0 0
    %250 = vmatmul.mubr.bf16.gmra.mrb[0].mxu0 %v164
    %v251 = vpop.f32.mrb[0].mxu0
    %v252 = vadd.f32 %v168, %v251
    %v253 = vpop.f32.mrb[0].mxu0
    %v254 = vpop.f32.mrb[0].mxu0
    %v255 = vpop.f32.mrb[0].mxu0
    %256 = vdwg.mxu0
    %v257 = vmax.f32 %v252, 0.0
    %v258 = vpack.c.bf16 %v257, %v257
    %v259 = vlaneseq
    %v260 = vshrl.u32 %v259, 7
    %v261 = vsub.s32 0, %v260
    %v262 = vrot.slane %v107, %v261
    %v279 = vunpack.c.l.b16 %v73
    %v280 = vunpack.c.l.b16 %v74
    %v281 = vunpack.c.l.b16 %v75
    %v282 = vunpack.c.l.b16 %v76
    %v283 = vunpack.c.l.b16 %v77
    %v284 = vunpack.c.l.b16 %v78
    %v285 = vunpack.c.l.b16 %v79
    %v286 = vunpack.c.l.b16 %v80
    %v287 = vunpack.c.l.b16 %v81
    %v288 = vunpack.c.l.b16 %v82
    %v289 = vunpack.c.l.b16 %v83
    %v290 = vunpack.c.l.b16 %v84
    %v291 = vunpack.c.l.b16 %v85
    %v292 = vunpack.c.l.b16 %v86
    %v293 = vunpack.c.l.b16 %v87
    %v294 = vunpack.c.l.b16 %v88
    %v295 = vpack.c.b16 %v280, %v279
    %v296 = vpack.c.b16 %v282, %v281
    %v297 = vpack.c.b16 %v284, %v283
    %v298 = vpack.c.b16 %v286, %v285
    %v299 = vpack.c.b16 %v288, %v287
    %v300 = vpack.c.b16 %v290, %v289
    %v301 = vpack.c.b16 %v292, %v291
    %v302 = vpack.c.b16 %v294, %v293
    %311 = vmatprep.subr.bf16.mxu0 0
    %312 = vmatpush1.bf16.msra.mxu0 %v295
    %313 = vmatprep.subr.bf16.mxu0 0
    %314 = vmatpush1.bf16.msra.mxu0 %v296
    %315 = vmatprep.subr.bf16.mxu0 0
    %316 = vmatpush1.bf16.msra.mxu0 %v297
    %317 = vmatprep.subr.bf16.mxu0 0
    %318 = vmatpush1.bf16.msra.mxu0 %v298
    %319 = vmatprep.subr.bf16.mxu0 0
    %320 = vmatpush1.bf16.msra.mxu0 %v299
    %321 = vmatprep.subr.bf16.mxu0 0
    %322 = vmatpush1.bf16.msra.mxu0 %v300
    %323 = vmatprep.subr.bf16.mxu0 0
    %324 = vmatpush1.bf16.msra.mxu0 %v301
    %325 = vmatprep.subr.bf16.mxu0 0
    %326 = vmatpush1.bf16.msra.mxu0 %v302
    %327 = vmatprep.subr.bf16.mxu0 0
    %328 = vmatpush1.bf16.msra.mxu0 0
    %329 = vmatprep.subr.bf16.mxu0 0
    %330 = vmatpush1.bf16.msra.mxu0 0
    %331 = vmatprep.subr.bf16.mxu0 0
    %332 = vmatpush1.bf16.msra.mxu0 0
    %333 = vmatprep.subr.bf16.mxu0 0
    %334 = vmatpush1.bf16.msra.mxu0 0
    %335 = vmatprep.subr.bf16.mxu0 0
    %336 = vmatpush1.bf16.msra.mxu0 0
    %337 = vmatprep.subr.bf16.mxu0 0
    %338 = vmatpush1.bf16.msra.mxu0 0
    %339 = vmatprep.subr.bf16.mxu0 0
    %340 = vmatpush1.bf16.msra.mxu0 0
    %341 = vmatprep.subr.bf16.mxu0 0
    %342 = vmatpush1.bf16.msra.mxu0 0
    %343 = vmatprep.mubr.bf16.mxu0 0
    %344 = vmatmul.mubr.bf16.gmra.mrb[0].mxu0 %v258
    %v345 = vpop.f32.mrb[0].mxu0
    %v346 = vadd.f32 %v262, %v345
    %v347 = vpop.f32.mrb[0].mxu0
    %v348 = vpop.f32.mrb[0].mxu0
    %v349 = vpop.f32.mrb[0].mxu0
    %350 = vdwg.mxu0
    %v351 = vmax.f32 %v346, 0.0
    %v352 = vpack.c.bf16 %v351, %v351
    %v353 = vlaneseq
    %v354 = vshrl.u32 %v353, 7
    %v355 = vsub.s32 0, %v354
    %v356 = vrot.slane %v108, %v355
    %v373 = vunpack.c.l.b16 %v89
    %v374 = vunpack.c.l.b16 %v90
    %v375 = vunpack.c.l.b16 %v91
    %v376 = vunpack.c.l.b16 %v92
    %v377 = vunpack.c.l.b16 %v93
    %v378 = vunpack.c.l.b16 %v94
    %v379 = vunpack.c.l.b16 %v95
    %v380 = vunpack.c.l.b16 %v96
    %v381 = vunpack.c.l.b16 %v97
    %v382 = vunpack.c.l.b16 %v98
    %v383 = vunpack.c.l.b16 %v99
    %v384 = vunpack.c.l.b16 %v100
    %v385 = vunpack.c.l.b16 %v101
    %v386 = vunpack.c.l.b16 %v102
    %v387 = vunpack.c.l.b16 %v103
    %v388 = vunpack.c.l.b16 %v104
    %v389 = vpack.c.b16 %v374, %v373
    %v390 = vpack.c.b16 %v376, %v375
    %v391 = vpack.c.b16 %v378, %v377
    %v392 = vpack.c.b16 %v380, %v379
    %v393 = vpack.c.b16 %v382, %v381
    %v394 = vpack.c.b16 %v384, %v383
    %v395 = vpack.c.b16 %v386, %v385
    %v396 = vpack.c.b16 %v388, %v387
    %405 = vmatprep.subr.bf16.mxu0 0
    %406 = vmatpush1.bf16.msra.mxu0 %v389
    %407 = vmatprep.subr.bf16.mxu0 0
    %408 = vmatpush1.bf16.msra.mxu0 %v390
    %409 = vmatprep.subr.bf16.mxu0 0
    %410 = vmatpush1.bf16.msra.mxu0 %v391
    %411 = vmatprep.subr.bf16.mxu0 0
    %412 = vmatpush1.bf16.msra.mxu0 %v392
    %413 = vmatprep.subr.bf16.mxu0 0
    %414 = vmatpush1.bf16.msra.mxu0 %v393
    %415 = vmatprep.subr.bf16.mxu0 0
    %416 = vmatpush1.bf16.msra.mxu0 %v394
    %417 = vmatprep.subr.bf16.mxu0 0
    %418 = vmatpush1.bf16.msra.mxu0 %v395
    %419 = vmatprep.subr.bf16.mxu0 0
    %420 = vmatpush1.bf16.msra.mxu0 %v396
    %421 = vmatprep.subr.bf16.mxu0 0
    %422 = vmatpush1.bf16.msra.mxu0 0
    %423 = vmatprep.subr.bf16.mxu0 0
    %424 = vmatpush1.bf16.msra.mxu0 0
    %425 = vmatprep.subr.bf16.mxu0 0
    %426 = vmatpush1.bf16.msra.mxu0 0
    %427 = vmatprep.subr.bf16.mxu0 0
    %428 = vmatpush1.bf16.msra.mxu0 0
    %429 = vmatprep.subr.bf16.mxu0 0
    %430 = vmatpush1.bf16.msra.mxu0 0
    %431 = vmatprep.subr.bf16.mxu0 0
    %432 = vmatpush1.bf16.msra.mxu0 0
    %433 = vmatprep.subr.bf16.mxu0 0
    %434 = vmatpush1.bf16.msra.mxu0 0
    %435 = vmatprep.subr.bf16.mxu0 0
    %436 = vmatpush1.bf16.msra.mxu0 0
    %437 = vmatprep.mubr.bf16.mxu0 0
    %438 = vmatmul.mubr.bf16.gmra.mrb[0].mxu0 %v352
    %v439 = vpop.f32.mrb[0].mxu0
    %v440 = vadd.f32 %v356, %v439
    %v441 = vpop.f32.mrb[0].mxu0
    %v442 = vpop.f32.mrb[0].mxu0
    %v443 = vpop.f32.mrb[0].mxu0
    %444 = vdwg.mxu0
    %v445 = vsub.f32 0.0, %v440
    %v446 = vmul.f32 %v445, 1.442695
    %v447 = vpow.pop %v446
    %v448 = vadd.f32 %v447, 1.0
    %v449 = vrcp.pop %v448
    %v450 = vmul.f32 1.0, %v449
    %vm451 = vcmask 123904
    %452 = vst.msk [vmem:[#allocation8] sm:$0x3] %vm451, %v450
    // Predicated region
    $region26: #{tpu_custom_call.1} parent=1 // pred_check
      _
    $region27: #{tpu_custom_call.1} parent=1 // pred_check_branch
      %454 = sbr.rel (0) target = $region29
    $region28: #{tpu_custom_call.1} parent=1 // pred_region
      %s456 = ssub.s32 32, 32
      %457 = vsyncadd [#allocation4], %s456
      %s459 = sshll.u32 [#allocation8], 4
      %s460 = int_to_ptr.vmem [resolvable:$true] %s459
      %462 = dma.vmem_to_hbm [thread:$0]  %s460, 32, %s3, [#allocation4]
    $region29: #{tpu_custom_call.1} parent=1 // pred_fallthru
      _
    // Predicated region
    $region30: #{tpu_custom_call.1} parent=1 // pred_check
      _
    $region31: #{tpu_custom_call.1} parent=1 // pred_check_branch
      %464 = sbr.rel (0) target = $region33
    $region32: #{tpu_custom_call.1} parent=1 // pred_region
      %465 = dma.done [#allocation4], 32
    $region33: #{tpu_custom_call.1} parent=1 // pred_fallthru
      _
    %466 = vsyncpa [#allocation3], 1
    %467 = vsyncpa [#allocation6], 1
    %468 = vsyncpa [#allocation4], 1

</llo_original>
